<compile_context>
chip_gen: v7x
topology: tpu7x:2x2x1
jax: 0.10.0
libtpu: 0.0.40
codegen_flags: <defaults>
</compile_context>

<pallas_src>
import jax
import jax.numpy as jnp
from jax.experimental import pallas as pl
from jax.experimental.pallas import tpu as pltpu

_LANE = 128                       # TPU lane width
_CHUNK = 512                      # rows per in-kernel compute chunk (keeps vreg pressure low)
_MAX_TB = 16 * 1024               # batch-tile cap; (tb,10) f32 VMEM tile = 512*tb bytes
_F = 10                           # feature width of SimpleNet
_VMEM_LIMIT = 32 * 1024 * 1024    # raises v5e's 16 MiB default; == default on v6e/v7x


def _round_up(a, b):
    return ((a + b - 1) // b) * b


def _cdiv(a, b):
    return -(-a // b)


def _choose_tile(batch):
    """Pick batch tile (multiple of _CHUNK) and grid size.

    Big tiles to amortize the ~0.35 us per-grid-step overhead, but keep >= 2
    (even) grid steps when there is enough work so the 'parallel' batch axis can
    be sharded across both v7x TensorCores (harmless on v5e/v6e)."""
    bq = _round_up(batch, _CHUNK)
    n_steps = max(1, _cdiv(bq, _MAX_TB))
    if bq >= 2 * _CHUNK:
        n_steps = max(n_steps, 2)
    if n_steps > 1 and n_steps % 2 == 1:
        n_steps += 1
    tb = _round_up(_cdiv(bq, n_steps), _CHUNK)   # always <= _MAX_TB
    grid = _cdiv(batch, tb)
    return tb, grid


def _simplenet_kernel(x_ref, w1_ref, b1_ref, w2c_ref, b2_ref, oT_ref):
    # x_ref: (tb, 10) natural layout (batch on sublanes) -> contiguous HBM DMA.
    # oT_ref: (1, tb) lane-dense output (batch on lanes) -> unmasked vst + dense DMA.
    w1 = w1_ref[...]       # (10, 10) resident weights / biases (tiny)
    b1 = b1_ref[...]       # (10, 1)
    w2c = w2c_ref[...]     # (10, 1)
    b2 = b2_ref[...]       # (1, 1)

    tb = x_ref.shape[0]
    for c in range(tb // _CHUNK):            # static unroll, <= 32 chunks per tile
        lo, hi = c * _CHUNK, (c + 1) * _CHUNK
        # Feature-major chunk via XLU transpose -- the kernel is DMA-bound, so the
        # XLU slot is effectively free (pltpu.einshape would work equally well).
        xT = x_ref[lo:hi, :].T                                          # (10, CHUNK)
        # fc1 on the MXU with f32 accumulation.
        h = jnp.dot(w1, xT, preferred_element_type=jnp.float32)         # (10, CHUNK)
        h = jnp.maximum(h + b1, 0.0)                                    # bias + ReLU (VPU)
        # fc2 (out_features == 1): VPU broadcast-multiply + XLU sublane reduce;
        # a full MXU pass would be wasted here.
        out = jnp.sum(h * w2c, axis=0, keepdims=True) + b2              # (1, CHUNK)
        oT_ref[:, lo:hi] = out.astype(oT_ref.dtype)


def simplenet_forward(x, w1, b1, w2, b2):
    """x: [B, 10] f32; w1: [10, 10] (out,in); b1: [10]; w2: [1, 10] (out,in); b2: [1].

    Returns [B, 1] f32 — same math as the PyTorch module."""
    B, F = x.shape
    assert F == _F and w1.shape == (F, F) and w2.shape == (1, F)

    tb, grid = _choose_tile(B)

    # Tiny wrapper-side reshapes only (no pad, no transpose of x): column-shaped
    # bias / fc2 weight so they lane-broadcast inside the kernel.
    b1c = b1.reshape(F, 1)     # (10, 1)
    w2c = w2.T                 # (10, 1)
    b2r = b2.reshape(1, 1)     # (1, 1)

    covered = grid * tb        # grid-covered (padded) batch, for the cost estimate
    cost = pl.CostEstimate(
        flops=2 * F * F * covered + 2 * F * covered,          # fc1 + fc2
        transcendentals=0,
        bytes_accessed=4 * (covered * F + covered + F * F + 2 * F + 1),
    )

    outT = pl.pallas_call(
        _simplenet_kernel,
        out_shape=jax.ShapeDtypeStruct((1, B), jnp.float32),
        grid=(grid,),
        in_specs=[
            pl.BlockSpec((tb, F), lambda i: (i, 0)),   # x streams through VMEM (double-buffered)
            pl.BlockSpec((F, F), lambda i: (0, 0)),    # W1 resident
            pl.BlockSpec((F, 1), lambda i: (0, 0)),    # b1 resident
            pl.BlockSpec((F, 1), lambda i: (0, 0)),    # w2 column resident
            pl.BlockSpec((1, 1), lambda i: (0, 0)),    # b2 resident
        ],
        out_specs=pl.BlockSpec((1, tb), lambda i: (0, i)),     # lane-dense output
        compiler_params=pltpu.CompilerParams(
            dimension_semantics=("parallel",),   # megacore sharding on v7x
            vmem_limit_bytes=_VMEM_LIMIT,
        ),
        cost_estimate=cost,
    )(x, w1, b1c, w2c, b2r)

    return outT[0, :].reshape(B, 1)


def init_params(key):
    """Deterministic init mimicking PyTorch nn.Linear default (U[-1/sqrt(fan_in), +])."""
    k1, k2, k3, k4 = jax.random.split(key, 4)
    bound = 1.0 / jnp.sqrt(10.0)
    w1 = jax.random.uniform(k1, (10, 10), jnp.float32, -bound, bound)  # (out, in)
    b1 = jax.random.uniform(k2, (10,), jnp.float32, -bound, bound)
    w2 = jax.random.uniform(k3, (1, 10), jnp.float32, -bound, bound)   # (out, in)
    b2 = jax.random.uniform(k4, (1,), jnp.float32, -bound, bound)
    return w1, b1, w2, b2


if __name__ == "__main__":
    key = jax.random.PRNGKey(0)
    kx, kp = jax.random.split(key)

    B = 8
    x = jax.random.normal(kx, (B, 10), jnp.float32)
    w1, b1, w2, b2 = init_params(kp)

    out = simplenet_forward(x, w1, b1, w2, b2)
    out = jax.block_until_ready(out)

    # Reference check in plain JAX (same math as the PyTorch module).
    ref = jnp.maximum(x @ w1.T + b1, 0.0) @ w2.T + b2
    assert out.shape == (B, 1)
    assert jnp.allclose(out, ref, atol=1e-5, rtol=1e-5)

    print("KERNEL_OK")
</pallas_src>

<mosaic_0001>
module attributes {stable_mosaic.version = 11 : i64} {
  func.func @_simplenet_kernel(%arg0: i32, %arg1: memref<512x10xf32, #tpu.memory_space<vmem>>, %arg2: memref<10x10xf32, #tpu.memory_space<vmem>>, %arg3: memref<10x1xf32, #tpu.memory_space<vmem>>, %arg4: memref<10x1xf32, #tpu.memory_space<vmem>>, %arg5: memref<1x1xf32, #tpu.memory_space<vmem>>, %arg6: memref<1x512xf32, #tpu.memory_space<vmem>>) attributes {dimension_semantics = [#tpu.dimension_semantics<parallel>], iteration_bounds = array<i64: 1>, scalar_prefetch = 0 : i64, scratch_operands = 0 : i64, tpu.core_type = #tpu.core_type<tc>, window_params = [{transform_indices = @transform_0, window_bounds = array<i64: 512, 10>}, {pipeline_mode = #tpu.pipeline_mode<synchronous>, transform_indices = @transform_1, window_bounds = array<i64: 10, 10>}, {pipeline_mode = #tpu.pipeline_mode<synchronous>, transform_indices = @transform_2, window_bounds = array<i64: 10, 1>}, {pipeline_mode = #tpu.pipeline_mode<synchronous>, transform_indices = @transform_3, window_bounds = array<i64: 10, 1>}, {pipeline_mode = #tpu.pipeline_mode<synchronous>, transform_indices = @transform_4, window_bounds = array<i64: 1, 1>}, {transform_indices = @transform_5, window_bounds = array<i64: 1, 512>}]} {
    %c0 = arith.constant 0 : index
    %c0_0 = arith.constant 0 : index
    %0 = vector.load %arg2[%c0, %c0_0] : memref<10x10xf32, #tpu.memory_space<vmem>>, vector<10x10xf32>
    %c0_1 = arith.constant 0 : index
    %c0_2 = arith.constant 0 : index
    %1 = vector.load %arg3[%c0_1, %c0_2] : memref<10x1xf32, #tpu.memory_space<vmem>>, vector<10x1xf32>
    %c0_3 = arith.constant 0 : index
    %c0_4 = arith.constant 0 : index
    %2 = vector.load %arg4[%c0_3, %c0_4] : memref<10x1xf32, #tpu.memory_space<vmem>>, vector<10x1xf32>
    %c0_5 = arith.constant 0 : index
    %c0_6 = arith.constant 0 : index
    %3 = vector.load %arg5[%c0_5, %c0_6] : memref<1x1xf32, #tpu.memory_space<vmem>>, vector<1x1xf32>
    %c0_7 = arith.constant 0 : index
    %c0_8 = arith.constant 0 : index
    %4 = vector.load %arg1[%c0_7, %c0_8] : memref<512x10xf32, #tpu.memory_space<vmem>>, vector<512x10xf32>
    %5 = tpu.transpose %4, [1, 0] : vector<512x10xf32> -> vector<10x512xf32>
    %cst = arith.constant dense<0.000000e+00> : vector<10x512xf32>
    %6 = tpu.matmul %0, %5, %cst {dimension_numbers = #tpu.dot_dimension_numbers<[1], [0], [0], [1], [0, 0, 1, 1], [], []>} : vector<10x10xf32>, vector<10x512xf32>, vector<10x512xf32> -> vector<10x512xf32>
    %7 = vector.broadcast %1 : vector<10x1xf32> to vector<10x512xf32>
    %8 = arith.addf %6, %7 : vector<10x512xf32>
    %cst_9 = arith.constant 0.000000e+00 : f32
    %9 = vector.broadcast %cst_9 : f32 to vector<10x512xf32>
    %10 = arith.maximumf %8, %9 : vector<10x512xf32>
    %11 = vector.broadcast %2 : vector<10x1xf32> to vector<10x512xf32>
    %12 = arith.mulf %10, %11 : vector<10x512xf32>
    %cst_10 = arith.constant dense<0.000000e+00> : vector<512xf32>
    %13 = vector.multi_reduction <add>, %12, %cst_10 [0] : vector<10x512xf32> to vector<512xf32>
    %14 = vector.shape_cast %13 : vector<512xf32> to vector<1x512xf32>
    %15 = vector.broadcast %3 : vector<1x1xf32> to vector<1x512xf32>
    %16 = arith.addf %14, %15 : vector<1x512xf32>
    %c0_11 = arith.constant 0 : index
    %c0_12 = arith.constant 0 : index
    %17 = vector.load %arg6[%c0_11, %c0_12] : memref<1x512xf32, #tpu.memory_space<vmem>>, vector<1x512xf32>
    tpu.vector_store %arg6[%c0_11, %c0_12], %16 {strides = array<i32>} : memref<1x512xf32, #tpu.memory_space<vmem>>, vector<1x512xf32>,
    return
  }
  func.func @transform_0(%arg0: i32) -> (i32, i32) {
    %c0_i32 = arith.constant 0 : i32
    %c0_i32_0 = arith.constant 0 : i32
    return %arg0, %c0_i32 : i32, i32
  }
  func.func @transform_1(%arg0: i32) -> (i32, i32) {
    %c0_i32 = arith.constant 0 : i32
    %c0_i32_0 = arith.constant 0 : i32
    %c0_i32_1 = arith.constant 0 : i32
    return %c0_i32, %c0_i32_0 : i32, i32
  }
  func.func @transform_2(%arg0: i32) -> (i32, i32) {
    %c0_i32 = arith.constant 0 : i32
    %c0_i32_0 = arith.constant 0 : i32
    %c0_i32_1 = arith.constant 0 : i32
    return %c0_i32, %c0_i32_0 : i32, i32
  }
  func.func @transform_3(%arg0: i32) -> (i32, i32) {
    %c0_i32 = arith.constant 0 : i32
    %c0_i32_0 = arith.constant 0 : i32
    %c0_i32_1 = arith.constant 0 : i32
    return %c0_i32, %c0_i32_0 : i32, i32
  }
  func.func @transform_4(%arg0: i32) -> (i32, i32) {
    %c0_i32 = arith.constant 0 : i32
    %c0_i32_0 = arith.constant 0 : i32
    %c0_i32_1 = arith.constant 0 : i32
    return %c0_i32, %c0_i32_0 : i32, i32
  }
  func.func @transform_5(%arg0: i32) -> (i32, i32) {
    %c0_i32 = arith.constant 0 : i32
    %c0_i32_0 = arith.constant 0 : i32
    return %c0_i32, %arg0 : i32, i32
  }
}

</mosaic_0001>

<llo_original>
// kernel: tpu_custom_call.1
$region0: #{tpu_custom_call.1}
  #allocation0 [shape = 'u32[]', space=smem, size = 0x4, offset = 0x4, fixed_abs, tag = 'smem constant byte address 0x4 - core index']
  #allocation1 [shape = 'u32[144,128]{1,0:T(1,128)}', space=vmem, size = 0x12000, scoped, tag = 'internal scratch']
  #allocation2 [shape = 'f32[1,1]{1,0:T(1,128)S(1)}', space=vmem, size = 0x200, scoped, tag = 'scoped memory for tpu_custom_call.1']
  %s0 = inlined_call_operand.vmem [shape: f32[8,10], index: 0, kind: input, shape index: {}]
  %s1 = inlined_call_operand.vmem [shape: f32[10,10], index: 1, kind: input, shape index: {}]
  %s2 = inlined_call_operand.vmem [shape: f32[10,1], index: 2, kind: input, shape index: {}]
  %s3 = inlined_call_operand.vmem [shape: f32[10,1], index: 3, kind: input, shape index: {}]
  %s4 = inlined_call_operand.<no memory space> [shape: f32[1,1], index: 4, kind: input, shape index: {}]
  %s5 = inlined_call_operand.hbm [shape: f32[1,8], index: 5, kind: output, shape index: {}]
  %s6 = sld [smem:[#allocation0]]
  $region30: #{tpu_custom_call.1} parent=0
    _
  %s8 = ssub.s32 1, %s6
  %s9 = scalar_select 0, %s8, %s6
  %v10 = vstv %s4
  %11 = vst [vmem:[#allocation2] sm:$0x1] %v10
  $region1: #{tpu_custom_call.1} parent=0
    #allocation3 [shape = 'u8[2048]{0}', space=vmem, size = 0x800, scoped, tag = 'output window, operand 0, single buffered']
    #allocation4 [shape = 's32[1]{0}', space=sflag, size = 0x4, scoped, tag = 'scoped memory for tpu_custom_call.1']
    %12 = vsyncpa [#allocation4], 0
    // Predicated region
    $region2: #{tpu_custom_call.1} parent=1 // pred_check
      _
    $region3: #{tpu_custom_call.1} parent=1 // pred_check_branch
      %14 = sbr.rel (0) target = $region5
    $region4: #{tpu_custom_call.1} parent=1 // pred_region
      _
    $region5: #{tpu_custom_call.1} parent=1 // pred_fallthru
      _
    // Predicated region
    $region6: #{tpu_custom_call.1} parent=1 // pred_check
      _
    $region7: #{tpu_custom_call.1} parent=1 // pred_check_branch
      %16 = sbr.rel (0) target = $region9
    $region8: #{tpu_custom_call.1} parent=1 // pred_region
      _
    $region9: #{tpu_custom_call.1} parent=1 // pred_fallthru
      _
    // Predicated region
    $region10: #{tpu_custom_call.1} parent=1 // pred_check
      _
    $region11: #{tpu_custom_call.1} parent=1 // pred_check_branch
      %18 = sbr.rel (0) target = $region13
    $region12: #{tpu_custom_call.1} parent=1 // pred_region
      _
    $region13: #{tpu_custom_call.1} parent=1 // pred_fallthru
      _
    // Predicated region
    $region14: #{tpu_custom_call.1} parent=1 // pred_check
      _
    $region15: #{tpu_custom_call.1} parent=1 // pred_check_branch
      %20 = sbr.rel (0) target = $region17
    $region16: #{tpu_custom_call.1} parent=1 // pred_region
      _
    $region17: #{tpu_custom_call.1} parent=1 // pred_fallthru
      _
    // Predicated region
    $region18: #{tpu_custom_call.1} parent=1 // pred_check
      _
    $region19: #{tpu_custom_call.1} parent=1 // pred_check_branch
      %22 = sbr.rel (0) target = $region21
    $region20: #{tpu_custom_call.1} parent=1 // pred_region
      _
    $region21: #{tpu_custom_call.1} parent=1 // pred_fallthru
      _
    %v23 = vld [vmem:[%s1] sm:$0xff]
    %v24 = vld [vmem:[%s1 + $0x8] sm:$0x3]
    %v25 = vld [vmem:[%s2] sm:$0xff]
    %v26 = vld [vmem:[%s2 + $0x8] sm:$0x3]
    %v27 = vld [vmem:[%s3] sm:$0xff]
    %v28 = vld [vmem:[%s3 + $0x8] sm:$0x3]
    %v29 = vld [vmem:[#allocation2] sm:$0x1]
    %v30 = vld [vmem:[%s0] sm:$0xff]
    %v31 = vld [vmem:[%s0 + $0x8] sm:$0xff]
    %v32 = vld [vmem:[%s0 + $0x10] sm:$0xff]
    %v33 = vld [vmem:[%s0 + $0x18] sm:$0xff]
    %v34 = vld [vmem:[%s0 + $0x20] sm:$0xff]
    %v35 = vld [vmem:[%s0 + $0x28] sm:$0xff]
    %v36 = vld [vmem:[%s0 + $0x30] sm:$0xff]
    %v37 = vld [vmem:[%s0 + $0x38] sm:$0xff]
    %v38 = vld [vmem:[%s0 + $0x40] sm:$0xff]
    %v39 = vld [vmem:[%s0 + $0x48] sm:$0xff]
    %v40 = vld [vmem:[%s0 + $0x50] sm:$0xff]
    %v41 = vld [vmem:[%s0 + $0x58] sm:$0xff]
    %v42 = vld [vmem:[%s0 + $0x60] sm:$0xff]
    %v43 = vld [vmem:[%s0 + $0x68] sm:$0xff]
    %v44 = vld [vmem:[%s0 + $0x70] sm:$0xff]
    %v45 = vld [vmem:[%s0 + $0x78] sm:$0xff]
    %v46 = vld [vmem:[%s0 + $0x80] sm:$0xff]
    %v47 = vld [vmem:[%s0 + $0x88] sm:$0xff]
    %v48 = vld [vmem:[%s0 + $0x90] sm:$0xff]
    %v49 = vld [vmem:[%s0 + $0x98] sm:$0xff]
    %v50 = vld [vmem:[%s0 + $0xa0] sm:$0xff]
    %v51 = vld [vmem:[%s0 + $0xa8] sm:$0xff]
    %v52 = vld [vmem:[%s0 + $0xb0] sm:$0xff]
    %v53 = vld [vmem:[%s0 + $0xb8] sm:$0xff]
    %v54 = vld [vmem:[%s0 + $0xc0] sm:$0xff]
    %v55 = vld [vmem:[%s0 + $0xc8] sm:$0xff]
    %v56 = vld [vmem:[%s0 + $0xd0] sm:$0xff]
    %v57 = vld [vmem:[%s0 + $0xd8] sm:$0xff]
    %v58 = vld [vmem:[%s0 + $0xe0] sm:$0xff]
    %v59 = vld [vmem:[%s0 + $0xe8] sm:$0xff]
    %v60 = vld [vmem:[%s0 + $0xf0] sm:$0xff]
    %v61 = vld [vmem:[%s0 + $0xf8] sm:$0xff]
    %v62 = vld [vmem:[%s0 + $0x100] sm:$0xff]
    %v63 = vld [vmem:[%s0 + $0x108] sm:$0xff]
    %v64 = vld [vmem:[%s0 + $0x110] sm:$0xff]
    %v65 = vld [vmem:[%s0 + $0x118] sm:$0xff]
    %v66 = vld [vmem:[%s0 + $0x120] sm:$0xff]
    %v67 = vld [vmem:[%s0 + $0x128] sm:$0xff]
    %v68 = vld [vmem:[%s0 + $0x130] sm:$0xff]
    %v69 = vld [vmem:[%s0 + $0x138] sm:$0xff]
    %v70 = vld [vmem:[%s0 + $0x140] sm:$0xff]
    %v71 = vld [vmem:[%s0 + $0x148] sm:$0xff]
    %v72 = vld [vmem:[%s0 + $0x150] sm:$0xff]
    %v73 = vld [vmem:[%s0 + $0x158] sm:$0xff]
    %v74 = vld [vmem:[%s0 + $0x160] sm:$0xff]
    %v75 = vld [vmem:[%s0 + $0x168] sm:$0xff]
    %v76 = vld [vmem:[%s0 + $0x170] sm:$0xff]
    %v77 = vld [vmem:[%s0 + $0x178] sm:$0xff]
    %v78 = vld [vmem:[%s0 + $0x180] sm:$0xff]
    %v79 = vld [vmem:[%s0 + $0x188] sm:$0xff]
    %v80 = vld [vmem:[%s0 + $0x190] sm:$0xff]
    %v81 = vld [vmem:[%s0 + $0x198] sm:$0xff]
    %v82 = vld [vmem:[%s0 + $0x1a0] sm:$0xff]
    %v83 = vld [vmem:[%s0 + $0x1a8] sm:$0xff]
    %v84 = vld [vmem:[%s0 + $0x1b0] sm:$0xff]
    %v85 = vld [vmem:[%s0 + $0x1b8] sm:$0xff]
    %v86 = vld [vmem:[%s0 + $0x1c0] sm:$0xff]
    %v87 = vld [vmem:[%s0 + $0x1c8] sm:$0xff]
    %v88 = vld [vmem:[%s0 + $0x1d0] sm:$0xff]
    %v89 = vld [vmem:[%s0 + $0x1d8] sm:$0xff]
    %v90 = vld [vmem:[%s0 + $0x1e0] sm:$0xff]
    %v91 = vld [vmem:[%s0 + $0x1e8] sm:$0xff]
    %v92 = vld [vmem:[%s0 + $0x1f0] sm:$0xff]
    %v93 = vld [vmem:[%s0 + $0x1f8] sm:$0xff]
    %95 = vset.pattern.permute.xlu0 0
    %96 = vperm.xlu0 %95, %v25
    %v97 = vpop.permute.xlu0 %96
    %100 = vset.pattern.permute.xlu0 0
    %101 = vperm.xlu0 %100, %v26
    %v102 = vpop.permute.xlu0 %101
    %vm104 = vcmask 80896
    %v106 = vsel %vm104, %v23, 0
    %v109 = vsel %vm104, %v24, 0
    %v112 = vsel %vm104, %v30, 0
    %v115 = vsel %vm104, %v31, 0
    %v118 = vsel %vm104, %v32, 0
    %v121 = vsel %vm104, %v33, 0
    %v124 = vsel %vm104, %v34, 0
    %v127 = vsel %vm104, %v35, 0
    %v130 = vsel %vm104, %v36, 0
    %v133 = vsel %vm104, %v37, 0
    %v136 = vsel %vm104, %v38, 0
    %v139 = vsel %vm104, %v39, 0
    %v142 = vsel %vm104, %v40, 0
    %v145 = vsel %vm104, %v41, 0
    %v148 = vsel %vm104, %v42, 0
    %v151 = vsel %vm104, %v43, 0
    %v154 = vsel %vm104, %v44, 0
    %v157 = vsel %vm104, %v45, 0
    %v160 = vsel %vm104, %v46, 0
    %v163 = vsel %vm104, %v47, 0
    %v166 = vsel %vm104, %v48, 0
    %v169 = vsel %vm104, %v49, 0
    %v172 = vsel %vm104, %v50, 0
    %v175 = vsel %vm104, %v51, 0
    %v178 = vsel %vm104, %v52, 0
    %v181 = vsel %vm104, %v53, 0
    %v184 = vsel %vm104, %v54, 0
    %v187 = vsel %vm104, %v55, 0
    %v190 = vsel %vm104, %v56, 0
    %v193 = vsel %vm104, %v57, 0
    %v196 = vsel %vm104, %v58, 0
    %v199 = vsel %vm104, %v59, 0
    %v202 = vsel %vm104, %v60, 0
    %v205 = vsel %vm104, %v61, 0
    %v208 = vsel %vm104, %v62, 0
    %v211 = vsel %vm104, %v63, 0
    %v214 = vsel %vm104, %v64, 0
    %v217 = vsel %vm104, %v65, 0
    %v220 = vsel %vm104, %v66, 0
    %v223 = vsel %vm104, %v67, 0
    %v226 = vsel %vm104, %v68, 0
    %v229 = vsel %vm104, %v69, 0
    %v232 = vsel %vm104, %v70, 0
    %v235 = vsel %vm104, %v71, 0
    %v238 = vsel %vm104, %v72, 0
    %v241 = vsel %vm104, %v73, 0
    %v244 = vsel %vm104, %v74, 0
    %v247 = vsel %vm104, %v75, 0
    %v250 = vsel %vm104, %v76, 0
    %v253 = vsel %vm104, %v77, 0
    %v256 = vsel %vm104, %v78, 0
    %v259 = vsel %vm104, %v79, 0
    %v262 = vsel %vm104, %v80, 0
    %v265 = vsel %vm104, %v81, 0
    %v268 = vsel %vm104, %v82, 0
    %v271 = vsel %vm104, %v83, 0
    %v274 = vsel %vm104, %v84, 0
    %v277 = vsel %vm104, %v85, 0
    %v280 = vsel %vm104, %v86, 0
    %v283 = vsel %vm104, %v87, 0
    %v286 = vsel %vm104, %v88, 0
    %v289 = vsel %vm104, %v89, 0
    %v292 = vsel %vm104, %v90, 0
    %v295 = vsel %vm104, %v91, 0
    %v298 = vsel %vm104, %v92, 0
    %v301 = vsel %vm104, %v93, 0
    %303 = vmatprep.subr.mxu0 0.0
    %304 = vmatpush1.xpose.msra.mxu0 %v112
    %305 = vmatprep.subr.mxu0 0.0
    %306 = vmatpush1.xpose.msra.mxu0 %v115
    %307 = vmatprep.subr.mxu0 0.0
    %308 = vmatpush1.xpose.msra.mxu0 %v118
    %309 = vmatprep.subr.mxu0 0.0
    %310 = vmatpush1.xpose.msra.mxu0 %v121
    %311 = vmatprep.subr.mxu0 0.0
    %312 = vmatpush1.xpose.msra.mxu0 %v124
    %313 = vmatprep.subr.mxu0 0.0
    %314 = vmatpush1.xpose.msra.mxu0 %v127
    %315 = vmatprep.subr.mxu0 0.0
    %316 = vmatpush1.xpose.msra.mxu0 %v130
    %317 = vmatprep.subr.mxu0 0.0
    %318 = vmatpush1.xpose.msra.mxu0 %v133
    %319 = vmatprep.subr.mxu0 0.0
    %320 = vmatpush1.xpose.msra.mxu0 %v136
    %321 = vmatprep.subr.mxu0 0.0
    %322 = vmatpush1.xpose.msra.mxu0 %v139
    %323 = vmatprep.subr.mxu0 0.0
    %324 = vmatpush1.xpose.msra.mxu0 %v142
    %325 = vmatprep.subr.mxu0 0.0
    %326 = vmatpush1.xpose.msra.mxu0 %v145
    %327 = vmatprep.subr.mxu0 0.0
    %328 = vmatpush1.xpose.msra.mxu0 %v148
    %329 = vmatprep.subr.mxu0 0.0
    %330 = vmatpush1.xpose.msra.mxu0 %v151
    %331 = vmatprep.subr.mxu0 0.0
    %332 = vmatpush1.xpose.msra.mxu0 %v154
    %333 = vmatprep.subr.mxu0 0.0
    %334 = vmatpush1.xpose.msra.mxu0 %v157
    %335 = vmatprep.subr.mxu0 0.0
    %336 = vmatpush1.xpose.msra.mxu0 %v160
    %337 = vmatprep.subr.mxu0 0.0
    %338 = vmatpush1.xpose.msra.mxu0 %v163
    %339 = vmatprep.subr.mxu0 0.0
    %340 = vmatpush1.xpose.msra.mxu0 %v166
    %341 = vmatprep.subr.mxu0 0.0
    %342 = vmatpush1.xpose.msra.mxu0 %v169
    %343 = vmatprep.subr.mxu0 0.0
    %344 = vmatpush1.xpose.msra.mxu0 %v172
    %345 = vmatprep.subr.mxu0 0.0
    %346 = vmatpush1.xpose.msra.mxu0 %v175
    %347 = vmatprep.subr.mxu0 0.0
    %348 = vmatpush1.xpose.msra.mxu0 %v178
    %349 = vmatprep.subr.mxu0 0.0
    %350 = vmatpush1.xpose.msra.mxu0 %v181
    %351 = vmatprep.subr.mxu0 0.0
    %352 = vmatpush1.xpose.msra.mxu0 %v184
    %353 = vmatprep.subr.mxu0 0.0
    %354 = vmatpush1.xpose.msra.mxu0 %v187
    %355 = vmatprep.subr.mxu0 0.0
    %356 = vmatpush1.xpose.msra.mxu0 %v190
    %357 = vmatprep.subr.mxu0 0.0
    %358 = vmatpush1.xpose.msra.mxu0 %v193
    %359 = vmatprep.subr.mxu0 0.0
    %360 = vmatpush1.xpose.msra.mxu0 %v196
    %361 = vmatprep.subr.mxu0 0.0
    %362 = vmatpush1.xpose.msra.mxu0 %v199
    %363 = vmatprep.subr.mxu0 0.0
    %364 = vmatpush1.xpose.msra.mxu0 %v202
    %365 = vmatprep.subr.mxu0 0.0
    %366 = vmatpush1.xpose.msra.mxu0 %v205
    %367 = vmatprep.mubr.f32.mxu0 0.0
    %368 = vmatmul.mubr.f32.gmra.mrb[0].mxu0 %v106
    %v369 = vpop.f32.mrb[0].mxu0
    %v370 = vadd.f32 %v97, %v369
    %v371 = vpop.f32.mrb[0].mxu0
    %v372 = vadd.f32 %v97, %v371
    %373 = vmatprep.mubr.f32.mxu0 0.0
    %374 = vmatmul.mubr.f32.gmra.mrb[0].mxu0 %v109
    %v375 = vpop.f32.mrb[0].mxu0
    %v376 = vadd.f32 %v102, %v375
    %v377 = vpop.f32.mrb[0].mxu0
    %v378 = vadd.f32 %v102, %v377
    %379 = vdwg.mxu0
    %380 = vmatprep.subr.mxu0 0.0
    %381 = vmatpush1.xpose.msra.mxu0 %v208
    %382 = vmatprep.subr.mxu0 0.0
    %383 = vmatpush1.xpose.msra.mxu0 %v211
    %384 = vmatprep.subr.mxu0 0.0
    %385 = vmatpush1.xpose.msra.mxu0 %v214
    %386 = vmatprep.subr.mxu0 0.0
    %387 = vmatpush1.xpose.msra.mxu0 %v217
    %388 = vmatprep.subr.mxu0 0.0
    %389 = vmatpush1.xpose.msra.mxu0 %v220
    %390 = vmatprep.subr.mxu0 0.0
    %391 = vmatpush1.xpose.msra.mxu0 %v223
    %392 = vmatprep.subr.mxu0 0.0
    %393 = vmatpush1.xpose.msra.mxu0 %v226
    %394 = vmatprep.subr.mxu0 0.0
    %395 = vmatpush1.xpose.msra.mxu0 %v229
    %396 = vmatprep.subr.mxu0 0.0
    %397 = vmatpush1.xpose.msra.mxu0 %v232
    %398 = vmatprep.subr.mxu0 0.0
    %399 = vmatpush1.xpose.msra.mxu0 %v235
    %400 = vmatprep.subr.mxu0 0.0
    %401 = vmatpush1.xpose.msra.mxu0 %v238
    %402 = vmatprep.subr.mxu0 0.0
    %403 = vmatpush1.xpose.msra.mxu0 %v241
    %404 = vmatprep.subr.mxu0 0.0
    %405 = vmatpush1.xpose.msra.mxu0 %v244
    %406 = vmatprep.subr.mxu0 0.0
    %407 = vmatpush1.xpose.msra.mxu0 %v247
    %408 = vmatprep.subr.mxu0 0.0
    %409 = vmatpush1.xpose.msra.mxu0 %v250
    %410 = vmatprep.subr.mxu0 0.0
    %411 = vmatpush1.xpose.msra.mxu0 %v253
    %412 = vmatprep.subr.mxu0 0.0
    %413 = vmatpush1.xpose.msra.mxu0 %v256
    %414 = vmatprep.subr.mxu0 0.0
    %415 = vmatpush1.xpose.msra.mxu0 %v259
    %416 = vmatprep.subr.mxu0 0.0
    %417 = vmatpush1.xpose.msra.mxu0 %v262
    %418 = vmatprep.subr.mxu0 0.0
    %419 = vmatpush1.xpose.msra.mxu0 %v265
    %420 = vmatprep.subr.mxu0 0.0
    %421 = vmatpush1.xpose.msra.mxu0 %v268
    %422 = vmatprep.subr.mxu0 0.0
    %423 = vmatpush1.xpose.msra.mxu0 %v271
    %424 = vmatprep.subr.mxu0 0.0
    %425 = vmatpush1.xpose.msra.mxu0 %v274
    %426 = vmatprep.subr.mxu0 0.0
    %427 = vmatpush1.xpose.msra.mxu0 %v277
    %428 = vmatprep.subr.mxu0 0.0
    %429 = vmatpush1.xpose.msra.mxu0 %v280
    %430 = vmatprep.subr.mxu0 0.0
    %431 = vmatpush1.xpose.msra.mxu0 %v283
    %432 = vmatprep.subr.mxu0 0.0
    %433 = vmatpush1.xpose.msra.mxu0 %v286
    %434 = vmatprep.subr.mxu0 0.0
    %435 = vmatpush1.xpose.msra.mxu0 %v289
    %436 = vmatprep.subr.mxu0 0.0
    %437 = vmatpush1.xpose.msra.mxu0 %v292
    %438 = vmatprep.subr.mxu0 0.0
    %439 = vmatpush1.xpose.msra.mxu0 %v295
    %440 = vmatprep.subr.mxu0 0.0
    %441 = vmatpush1.xpose.msra.mxu0 %v298
    %442 = vmatprep.subr.mxu0 0.0
    %443 = vmatpush1.xpose.msra.mxu0 %v301
    %444 = vmatprep.mubr.f32.mxu0 0.0
    %445 = vmatmul.mubr.f32.gmra.mrb[0].mxu0 %v106
    %v446 = vpop.f32.mrb[0].mxu0
    %v447 = vadd.f32 %v97, %v446
    %v448 = vpop.f32.mrb[0].mxu0
    %v449 = vadd.f32 %v97, %v448
    %450 = vmatprep.mubr.f32.mxu0 0.0
    %451 = vmatmul.mubr.f32.gmra.mrb[0].mxu0 %v109
    %v452 = vpop.f32.mrb[0].mxu0
    %v453 = vadd.f32 %v102, %v452
    %v454 = vpop.f32.mrb[0].mxu0
    %v455 = vadd.f32 %v102, %v454
    %456 = vdwg.mxu0
    %v457 = vmax.f32 %v370, 0.0
    %v458 = vmax.f32 %v372, 0.0
    %v459 = vmax.f32 %v447, 0.0
    %v460 = vmax.f32 %v449, 0.0
    %v461 = vmax.f32 %v376, 0.0
    %v462 = vmax.f32 %v378, 0.0
    %v463 = vmax.f32 %v453, 0.0
    %v464 = vmax.f32 %v455, 0.0
    %466 = vset.pattern.permute.xlu0 0
    %467 = vperm.xlu0 %466, %v27
    %v468 = vpop.permute.xlu0 %467
    %471 = vset.pattern.permute.xlu0 0
    %472 = vperm.xlu0 %471, %v28
    %v473 = vpop.permute.xlu0 %472
    %v475 = vmul.f32 %v457, %v468
    %v476 = vmul.f32 %v458, %v468
    %v477 = vmul.f32 %v459, %v468
    %v478 = vmul.f32 %v460, %v468
    %v479 = vmul.f32 %v461, %v473
    %v480 = vmul.f32 %v462, %v473
    %v481 = vmul.f32 %v463, %v473
    %v482 = vmul.f32 %v464, %v473
    %vm483 = vcmask 1041408
    %v484 = vsel %vm483, %v479, 0.0
    %v485 = vadd.f32 %v475, %v484
    %v486 = vrot.slane %v485, 4
    %v487 = vadd.f32 %v485, %v486
    %v488 = vrot.slane %v487, 2
    %v489 = vadd.f32 %v487, %v488
    %v490 = vrot.slane %v489, 1
    %v491 = vadd.f32 %v489, %v490
    %v492 = vsel %vm483, %v480, 0.0
    %v493 = vadd.f32 %v476, %v492
    %v494 = vrot.slane %v493, 4
    %v495 = vadd.f32 %v493, %v494
    %v496 = vrot.slane %v495, 2
    %v497 = vadd.f32 %v495, %v496
    %v498 = vrot.slane %v497, 1
    %v499 = vadd.f32 %v497, %v498
    %v500 = vsel %vm483, %v481, 0.0
    %v501 = vadd.f32 %v477, %v500
    %v502 = vrot.slane %v501, 4
    %v503 = vadd.f32 %v501, %v502
    %v504 = vrot.slane %v503, 2
    %v505 = vadd.f32 %v503, %v504
    %v506 = vrot.slane %v505, 1
    %v507 = vadd.f32 %v505, %v506
    %v508 = vsel %vm483, %v482, 0.0
    %v509 = vadd.f32 %v478, %v508
    %v510 = vrot.slane %v509, 4
    %v511 = vadd.f32 %v509, %v510
    %v512 = vrot.slane %v511, 2
    %v513 = vadd.f32 %v511, %v512
    %v514 = vrot.slane %v513, 1
    %v515 = vadd.f32 %v513, %v514
    %517 = vset.pattern.permute.xlu0 0
    %518 = vperm.xlu0 %517, %v29
    %v519 = vpop.permute.xlu0 %518
    %v521 = vlaneseq
    %v522 = vshrl.u32 %v521, 7
    %v523 = vsub.s32 0, %v522
    %v524 = vrot.slane %v519, %v523
    %v525 = vadd.f32 %v491, %v524
    %v526 = vadd.f32 %v499, %v524
    %v527 = vadd.f32 %v507, %v524
    %v528 = vadd.f32 %v515, %v524
    %v533 = vcombine.low %v525, %v526
    %v534 = vcombine.low %v527, %v528
    %v536 = vunpack.c.l.s4 1966171168
    %v537 = vunpack.c.0.s8 %v536
    %v538 = vlaneseq
    %v539 = vshrl.u32 %v538, 7
    %v540 = vsub.s32 %v537, %v539
    %v541 = vrot.slane %v533, %v540
    %v543 = vunpack.c.l.s4 1966171168
    %v544 = vunpack.c.0.s8 %v543
    %v545 = vlaneseq
    %v546 = vshrl.u32 %v545, 7
    %v547 = vsub.s32 %v544, %v546
    %v548 = vrot.slane %v534, %v547
    %v549 = vcombine.low %v541, %v548
    %v551 = vunpack.c.l.s4 1966171168
    %v552 = vunpack.c.0.s8 %v551
    %v553 = vlaneseq
    %v554 = vshrl.u32 %v553, 7
    %v555 = vsub.s32 %v552, %v554
    %v556 = vrot.slane %v549, %v555
    %v558 = vlaneseq
    %vm559 = vcmp.ge.s32.totalorder %v558, 0
    %vm560 = vcmp.lt.s32.totalorder %v558, 512
    %vm561 = vmand %vm559, %vm560
    %562 = vst.msk [vmem:[#allocation3] sm:$0xf] %vm561, %v556
    // Predicated region
    $region22: #{tpu_custom_call.1} parent=1 // pred_check
      _
    $region23: #{tpu_custom_call.1} parent=1 // pred_check_branch
      %564 = sbr.rel (0) target = $region25
    $region24: #{tpu_custom_call.1} parent=1 // pred_region
      %s566 = ssub.s32 64, 16
      %567 = vsyncadd [#allocation4], %s566
      %s569 = sshll.u32 [#allocation3], 4
      %s570 = int_to_ptr.vmem [resolvable:$true] %s569
      %572 = dma.vmem_to_hbm [thread:$0]  %s570, 16, %s5, [#allocation4]
    $region25: #{tpu_custom_call.1} parent=1 // pred_fallthru
      _
    // Predicated region
    $region26: #{tpu_custom_call.1} parent=1 // pred_check
      _
    $region27: #{tpu_custom_call.1} parent=1 // pred_check_branch
      %574 = sbr.rel (0) target = $region29
    $region28: #{tpu_custom_call.1} parent=1 // pred_region
      %575 = dma.done [#allocation4], 64
    $region29: #{tpu_custom_call.1} parent=1 // pred_fallthru
      _
    %576 = vsyncpa [#allocation4], 1

</llo_original>
